<compile_context>
chip_gen: v6e
topology: v6e:2x2x1
jax: 0.10.0
libtpu: 0.0.40
codegen_flags: <defaults>
</compile_context>

<pallas_src>
import functools

import jax
import jax.numpy as jnp
from jax.experimental import pallas as pl
from jax.experimental.pallas import tpu as pltpu

LANE = 128      # lane width: feature dims are padded to this
SUBLANE = 16    # bf16 packs two rows per sublane -> node dim padded to 16


def _round_up(x, m):
    return (x + m - 1) // m * m


def _preferred_row_tile():
    """Row tile: 256 on v6e/v7x (256-deep MXU), 128 otherwise. Perf-only choice."""
    try:
        info = pltpu.get_tpu_info()
        name = str(getattr(info, "chip_version", "")).lower()
        if ("v6" in name) or ("v7" in name) or ("6e" in name) or ("7x" in name):
            return 256
    except Exception:
        pass
    return 128


def _vmem_limit_bytes():
    """Generation-aware scoped-VMEM limit with ~20% headroom; safe fallback."""
    try:
        cap = int(pltpu.get_tpu_info().vmem_capacity_bytes)
        return max(16 * 1024 * 1024, int(cap * 0.8))
    except Exception:
        return 32 * 1024 * 1024


def _sage_layer_kernel(a_ref, inv_deg_ref, h_full_ref, h_self_ref,
                       w_l_ref, w_r_ref, b_ref, o_ref, *, apply_relu):
    """One SAGEConv layer for one row tile of nodes.

    a_ref:       [TM, Np]   bf16  exact 0/1 (edge-count) adjacency rows
    inv_deg_ref: [TM, 1]    f32   1 / max(deg, 1) for these rows
    h_full_ref:  [Np, Fp]   bf16  full previous-layer activations (VMEM-resident)
    h_self_ref:  [TM, Fp]   bf16  this tile's rows of h (self path)
    w_l_ref:     [Fp, Fp]   bf16  aggregate-path weight (zero-padded)
    w_r_ref:     [Fp, Fp]   bf16  self-path weight (zero-padded)
    b_ref:       [1,  Fp]   f32   bias (zero-padded)
    o_ref:       [TM, Fp]   bf16 (hidden layers) / f32 (last layer)
    """
    # Mean aggregation: 0/1 bf16 adjacency on the MXU, f32 accumulate,
    # 1/deg normalization as a free f32 VPU multiply in the epilogue.
    agg = jnp.dot(a_ref[...], h_full_ref[...],
                  preferred_element_type=jnp.float32) * inv_deg_ref[...]
    # Two separate projections (no [TM, 2*Fp] concat materialization).
    out = (jnp.dot(agg.astype(jnp.bfloat16), w_l_ref[...],
                   preferred_element_type=jnp.float32)
           + jnp.dot(h_self_ref[...], w_r_ref[...],
                     preferred_element_type=jnp.float32)
           + b_ref[...])
    if apply_relu:
        out = jnp.maximum(out, 0.0)
    o_ref[...] = out.astype(o_ref.dtype)


def _sage_layer(a, inv_deg, h, w_l, w_r, b, *, apply_relu, out_dtype, tm, vmem_limit):
    n_pad, f_pad = h.shape
    grid = (n_pad // tm,)

    flops = 2 * n_pad * n_pad * f_pad + 2 * (2 * n_pad * f_pad * f_pad)
    bytes_accessed = (a.size * 2 + inv_deg.size * 4 + 2 * h.size * 2
                      + (w_l.size + w_r.size) * 2 + b.size * 4
                      + n_pad * f_pad * jnp.dtype(out_dtype).itemsize)

    return pl.pallas_call(
        functools.partial(_sage_layer_kernel, apply_relu=apply_relu),
        out_shape=jax.ShapeDtypeStruct((n_pad, f_pad), out_dtype),
        grid_spec=pltpu.PrefetchScalarGridSpec(
            num_scalar_prefetch=0,
            grid=grid,
            in_specs=[
                pl.BlockSpec((tm, n_pad), lambda i: (i, 0)),      # A row tile
                pl.BlockSpec((tm, 1), lambda i: (i, 0)),          # 1/deg rows (f32)
                pl.BlockSpec((n_pad, f_pad), lambda i: (0, 0)),   # full h (resident)
                pl.BlockSpec((tm, f_pad), lambda i: (i, 0)),      # self-path rows of h
                pl.BlockSpec((f_pad, f_pad), lambda i: (0, 0)),   # W_l
                pl.BlockSpec((f_pad, f_pad), lambda i: (0, 0)),   # W_r
                pl.BlockSpec((1, f_pad), lambda i: (0, 0)),       # bias
            ],
            out_specs=pl.BlockSpec((tm, f_pad), lambda i: (i, 0)),
        ),
        compiler_params=pltpu.CompilerParams(
            dimension_semantics=("parallel",),                    # 2 TCs on v7x
            vmem_limit_bytes=vmem_limit,
        ),
        cost_estimate=pl.CostEstimate(flops=int(flops), transcendentals=0,
                                      bytes_accessed=int(bytes_accessed)),
    )(a, inv_deg, h, h, w_l, w_r, b)


def build_adjacency(edge_index, padded_nodes):
    """Exact 0/1 (edge-count) adjacency (bf16) + separate f32 inverse degree.

    A[i, j] = multiplicity of edge j -> i (small ints are exact in bf16);
    the 1/deg normalization is applied in the kernel's f32 epilogue.
    """
    # TODO(synk): replace dense O(N^2) adjacency with CSR neighbor lists +
    # PrefetchScalarGridSpec-driven sparse aggregation for large graphs.
    src, dst = edge_index[0], edge_index[1]
    a = jnp.zeros((padded_nodes, padded_nodes), jnp.float32)
    a = a.at[dst, src].add(1.0)
    deg = a.sum(axis=1, keepdims=True)
    inv_deg = 1.0 / jnp.maximum(deg, 1.0)
    return a.astype(jnp.bfloat16), inv_deg.astype(jnp.float32)


def init_graphsage_params(key, input_dim, hidden_dim):
    dims = [(input_dim, hidden_dim), (hidden_dim, hidden_dim), (hidden_dim, input_dim)]
    params = []
    for (fi, fo) in dims:
        key, k1, k2, k3 = jax.random.split(key, 4)
        scale = 1.0 / jnp.sqrt(fi)
        params.append(
            dict(
                w_l=jax.random.uniform(k1, (fi, fo), jnp.float32, -scale, scale),
                w_r=jax.random.uniform(k2, (fi, fo), jnp.float32, -scale, scale),
                b=jax.random.uniform(k3, (fo,), jnp.float32, -scale, scale),
            )
        )
    return params


def graphsage_forward(params, x, edge_index, edge_attr=None):
    # edge_attr is accepted for signature parity but unused (SAGEConv ignores it).
    del edge_attr
    n, f_in = x.shape
    num_layers = len(params)
    f_pad = LANE                      # feature dims (8 / 32) padded to one lane width

    # Node-dim padding: multiple of 16 for bf16 sublane packing; if larger than
    # the row tile, pad up to a multiple of the tile so the grid divides evenly.
    tm = _preferred_row_tile()
    n_pad = max(_round_up(n, SUBLANE), SUBLANE)
    if n_pad > tm:
        n_pad = _round_up(n_pad, tm)
    else:
        tm = n_pad

    vmem_limit = _vmem_limit_bytes()

    a, inv_deg = build_adjacency(edge_index, n_pad)

    # Lane/sublane-pad the node features; activations carried in bf16 between layers.
    h = jnp.zeros((n_pad, f_pad), jnp.bfloat16).at[:n, :f_in].set(x.astype(jnp.bfloat16))

    for layer, p in enumerate(params):
        fi, fo = p["w_l"].shape
        w_l = jnp.zeros((f_pad, f_pad), jnp.bfloat16).at[:fi, :fo].set(
            p["w_l"].astype(jnp.bfloat16))
        w_r = jnp.zeros((f_pad, f_pad), jnp.bfloat16).at[:fi, :fo].set(
            p["w_r"].astype(jnp.bfloat16))
        b = jnp.zeros((1, f_pad), jnp.float32).at[0, :fo].set(p["b"])
        last = layer == num_layers - 1
        h = _sage_layer(
            a, inv_deg, h, w_l, w_r, b,
            apply_relu=not last,
            out_dtype=jnp.float32 if last else jnp.bfloat16,
            tm=tm, vmem_limit=vmem_limit,
        )

    f_out = params[-1]["w_l"].shape[1]
    return h[:n, :f_out]


if __name__ == "__main__":
    key = jax.random.PRNGKey(0)
    k_x, k_e, k_attr, k_p = jax.random.split(key, 4)

    num_nodes = 16
    num_edges = 40
    input_dim = 8
    hidden_dim = 32

    x = jax.random.normal(k_x, (num_nodes, input_dim), jnp.float32)
    edge_index = jax.random.randint(k_e, (2, num_edges), 0, num_nodes, jnp.int32)
    edge_attr = jax.random.normal(k_attr, (num_edges, 4), jnp.float32)  # unused by SAGEConv

    params = init_graphsage_params(k_p, input_dim, hidden_dim)

    # Single jit hoists/fuses the dense adjacency build with the layer kernels.
    fwd = jax.jit(graphsage_forward)
    out = fwd(params, x, edge_index, edge_attr)
    jax.block_until_ready(out)
    assert out.shape == (num_nodes, input_dim)
    assert bool(jnp.all(jnp.isfinite(out)))
    print("KERNEL_OK")
</pallas_src>

<mosaic_0001>
module attributes {stable_mosaic.version = 11 : i64} {
  func.func private @main(%arg0: i32) attributes {dimension_semantics = [#tpu.dimension_semantics<core_parallel>], iteration_bounds = array<i64: 2>, tpu.core_type = #tpu.core_type<sc_scalar_subcore>, window_params = []} {
    return
  }
}

module attributes {stable_mosaic.version = 11 : i64} {
  func.func private @main(%arg0: i32) attributes {dimension_semantics = [#tpu.dimension_semantics<core_parallel>], iteration_bounds = array<i64: 2>, tpu.core_type = #tpu.core_type<sc_scalar_subcore>, window_params = []} {
    return
  }
}

module attributes {stable_mosaic.version = 11 : i64} {
  func.func @_sage_layer_kernel(%arg0: i32, %arg1: memref<16x16xbf16, #tpu.memory_space<vmem>>, %arg2: memref<16x1xf32, #tpu.memory_space<vmem>>, %arg3: memref<16x128xbf16, #tpu.memory_space<vmem>>, %arg4: memref<16x128xbf16, #tpu.memory_space<vmem>>, %arg5: memref<128x128xbf16, #tpu.memory_space<vmem>>, %arg6: memref<128x128xbf16, #tpu.memory_space<vmem>>, %arg7: memref<1x128xf32, #tpu.memory_space<vmem>>, %arg8: memref<16x128xbf16, #tpu.memory_space<vmem>>) attributes {dimension_semantics = [#tpu.dimension_semantics<parallel>], iteration_bounds = array<i64: 1>, scalar_prefetch = 0 : i64, scratch_operands = 0 : i64, tpu.core_type = #tpu.core_type<tc>, window_params = [{transform_indices = @transform_0, window_bounds = array<i64: 16, 16>}, {transform_indices = @transform_1, window_bounds = array<i64: 16, 1>}, {pipeline_mode = #tpu.pipeline_mode<synchronous>, transform_indices = @transform_2, window_bounds = array<i64: 16, 128>}, {transform_indices = @transform_3, window_bounds = array<i64: 16, 128>}, {pipeline_mode = #tpu.pipeline_mode<synchronous>, transform_indices = @transform_4, window_bounds = array<i64: 128, 128>}, {pipeline_mode = #tpu.pipeline_mode<synchronous>, transform_indices = @transform_5, window_bounds = array<i64: 128, 128>}, {pipeline_mode = #tpu.pipeline_mode<synchronous>, transform_indices = @transform_6, window_bounds = array<i64: 1, 128>}, {transform_indices = @transform_7, window_bounds = array<i64: 16, 128>}]} {
    %c0 = arith.constant 0 : index
    %c0_0 = arith.constant 0 : index
    %0 = vector.load %arg1[%c0, %c0_0] : memref<16x16xbf16, #tpu.memory_space<vmem>>, vector<16x16xbf16>
    %c0_1 = arith.constant 0 : index
    %c0_2 = arith.constant 0 : index
    %1 = vector.load %arg3[%c0_1, %c0_2] : memref<16x128xbf16, #tpu.memory_space<vmem>>, vector<16x128xbf16>
    %cst = arith.constant dense<0.000000e+00> : vector<16x128xf32>
    %2 = tpu.matmul %0, %1, %cst {dimension_numbers = #tpu.dot_dimension_numbers<[1], [0], [0], [1], [0, 0, 1, 1], [], []>} : vector<16x16xbf16>, vector<16x128xbf16>, vector<16x128xf32> -> vector<16x128xf32>
    %c0_3 = arith.constant 0 : index
    %c0_4 = arith.constant 0 : index
    %3 = vector.load %arg2[%c0_3, %c0_4] : memref<16x1xf32, #tpu.memory_space<vmem>>, vector<16x1xf32>
    %4 = vector.broadcast %3 : vector<16x1xf32> to vector<16x128xf32>
    %5 = arith.mulf %2, %4 : vector<16x128xf32>
    %6 = arith.truncf %5 : vector<16x128xf32> to vector<16x128xbf16>
    %c0_5 = arith.constant 0 : index
    %c0_6 = arith.constant 0 : index
    %7 = vector.load %arg5[%c0_5, %c0_6] : memref<128x128xbf16, #tpu.memory_space<vmem>>, vector<128x128xbf16>
    %cst_7 = arith.constant dense<0.000000e+00> : vector<16x128xf32>
    %8 = tpu.matmul %6, %7, %cst_7 {dimension_numbers = #tpu.dot_dimension_numbers<[1], [0], [0], [1], [0, 0, 1, 1], [], []>} : vector<16x128xbf16>, vector<128x128xbf16>, vector<16x128xf32> -> vector<16x128xf32>
    %c0_8 = arith.constant 0 : index
    %c0_9 = arith.constant 0 : index
    %9 = vector.load %arg4[%c0_8, %c0_9] : memref<16x128xbf16, #tpu.memory_space<vmem>>, vector<16x128xbf16>
    %c0_10 = arith.constant 0 : index
    %c0_11 = arith.constant 0 : index
    %10 = vector.load %arg6[%c0_10, %c0_11] : memref<128x128xbf16, #tpu.memory_space<vmem>>, vector<128x128xbf16>
    %cst_12 = arith.constant dense<0.000000e+00> : vector<16x128xf32>
    %11 = tpu.matmul %9, %10, %cst_12 {dimension_numbers = #tpu.dot_dimension_numbers<[1], [0], [0], [1], [0, 0, 1, 1], [], []>} : vector<16x128xbf16>, vector<128x128xbf16>, vector<16x128xf32> -> vector<16x128xf32>
    %12 = arith.addf %8, %11 : vector<16x128xf32>
    %c0_13 = arith.constant 0 : index
    %c0_14 = arith.constant 0 : index
    %13 = vector.load %arg7[%c0_13, %c0_14] : memref<1x128xf32, #tpu.memory_space<vmem>>, vector<1x128xf32>
    %14 = vector.broadcast %13 : vector<1x128xf32> to vector<16x128xf32>
    %15 = arith.addf %12, %14 : vector<16x128xf32>
    %cst_15 = arith.constant 0.000000e+00 : f32
    %16 = vector.broadcast %cst_15 : f32 to vector<16x128xf32>
    %17 = arith.maximumf %15, %16 : vector<16x128xf32>
    %18 = arith.truncf %17 : vector<16x128xf32> to vector<16x128xbf16>
    %c0_16 = arith.constant 0 : index
    %c0_17 = arith.constant 0 : index
    %19 = vector.load %arg8[%c0_16, %c0_17] : memref<16x128xbf16, #tpu.memory_space<vmem>>, vector<16x128xbf16>
    tpu.vector_store %arg8[%c0_16, %c0_17], %18 {strides = array<i32>} : memref<16x128xbf16, #tpu.memory_space<vmem>>, vector<16x128xbf16>,
    return
  }
  func.func @transform_0(%arg0: i32) -> (i32, i32) {
    %c0_i32 = arith.constant 0 : i32
    %c0_i32_0 = arith.constant 0 : i32
    return %arg0, %c0_i32 : i32, i32
  }
  func.func @transform_1(%arg0: i32) -> (i32, i32) {
    %c0_i32 = arith.constant 0 : i32
    %c0_i32_0 = arith.constant 0 : i32
    return %arg0, %c0_i32 : i32, i32
  }
  func.func @transform_2(%arg0: i32) -> (i32, i32) {
    %c0_i32 = arith.constant 0 : i32
    %c0_i32_0 = arith.constant 0 : i32
    %c0_i32_1 = arith.constant 0 : i32
    return %c0_i32, %c0_i32_0 : i32, i32
  }
  func.func @transform_3(%arg0: i32) -> (i32, i32) {
    %c0_i32 = arith.constant 0 : i32
    %c0_i32_0 = arith.constant 0 : i32
    return %arg0, %c0_i32 : i32, i32
  }
  func.func @transform_4(%arg0: i32) -> (i32, i32) {
    %c0_i32 = arith.constant 0 : i32
    %c0_i32_0 = arith.constant 0 : i32
    %c0_i32_1 = arith.constant 0 : i32
    return %c0_i32, %c0_i32_0 : i32, i32
  }
  func.func @transform_5(%arg0: i32) -> (i32, i32) {
    %c0_i32 = arith.constant 0 : i32
    %c0_i32_0 = arith.constant 0 : i32
    %c0_i32_1 = arith.constant 0 : i32
    return %c0_i32, %c0_i32_0 : i32, i32
  }
  func.func @transform_6(%arg0: i32) -> (i32, i32) {
    %c0_i32 = arith.constant 0 : i32
    %c0_i32_0 = arith.constant 0 : i32
    %c0_i32_1 = arith.constant 0 : i32
    return %c0_i32, %c0_i32_0 : i32, i32
  }
  func.func @transform_7(%arg0: i32) -> (i32, i32) {
    %c0_i32 = arith.constant 0 : i32
    %c0_i32_0 = arith.constant 0 : i32
    return %arg0, %c0_i32 : i32, i32
  }
}

module attributes {stable_mosaic.version = 11 : i64} {
  func.func @_sage_layer_kernel(%arg0: i32, %arg1: memref<16x16xbf16, #tpu.memory_space<vmem>>, %arg2: memref<16x1xf32, #tpu.memory_space<vmem>>, %arg3: memref<16x128xbf16, #tpu.memory_space<vmem>>, %arg4: memref<16x128xbf16, #tpu.memory_space<vmem>>, %arg5: memref<128x128xbf16, #tpu.memory_space<vmem>>, %arg6: memref<128x128xbf16, #tpu.memory_space<vmem>>, %arg7: memref<1x128xf32, #tpu.memory_space<vmem>>, %arg8: memref<16x128xf32, #tpu.memory_space<vmem>>) attributes {dimension_semantics = [#tpu.dimension_semantics<parallel>], iteration_bounds = array<i64: 1>, scalar_prefetch = 0 : i64, scratch_operands = 0 : i64, tpu.core_type = #tpu.core_type<tc>, window_params = [{transform_indices = @transform_0, window_bounds = array<i64: 16, 16>}, {transform_indices = @transform_1, window_bounds = array<i64: 16, 1>}, {pipeline_mode = #tpu.pipeline_mode<synchronous>, transform_indices = @transform_2, window_bounds = array<i64: 16, 128>}, {transform_indices = @transform_3, window_bounds = array<i64: 16, 128>}, {pipeline_mode = #tpu.pipeline_mode<synchronous>, transform_indices = @transform_4, window_bounds = array<i64: 128, 128>}, {pipeline_mode = #tpu.pipeline_mode<synchronous>, transform_indices = @transform_5, window_bounds = array<i64: 128, 128>}, {pipeline_mode = #tpu.pipeline_mode<synchronous>, transform_indices = @transform_6, window_bounds = array<i64: 1, 128>}, {transform_indices = @transform_7, window_bounds = array<i64: 16, 128>}]} {
    %c0 = arith.constant 0 : index
    %c0_0 = arith.constant 0 : index
    %0 = vector.load %arg1[%c0, %c0_0] : memref<16x16xbf16, #tpu.memory_space<vmem>>, vector<16x16xbf16>
    %c0_1 = arith.constant 0 : index
    %c0_2 = arith.constant 0 : index
    %1 = vector.load %arg3[%c0_1, %c0_2] : memref<16x128xbf16, #tpu.memory_space<vmem>>, vector<16x128xbf16>
    %cst = arith.constant dense<0.000000e+00> : vector<16x128xf32>
    %2 = tpu.matmul %0, %1, %cst {dimension_numbers = #tpu.dot_dimension_numbers<[1], [0], [0], [1], [0, 0, 1, 1], [], []>} : vector<16x16xbf16>, vector<16x128xbf16>, vector<16x128xf32> -> vector<16x128xf32>
    %c0_3 = arith.constant 0 : index
    %c0_4 = arith.constant 0 : index
    %3 = vector.load %arg2[%c0_3, %c0_4] : memref<16x1xf32, #tpu.memory_space<vmem>>, vector<16x1xf32>
    %4 = vector.broadcast %3 : vector<16x1xf32> to vector<16x128xf32>
    %5 = arith.mulf %2, %4 : vector<16x128xf32>
    %6 = arith.truncf %5 : vector<16x128xf32> to vector<16x128xbf16>
    %c0_5 = arith.constant 0 : index
    %c0_6 = arith.constant 0 : index
    %7 = vector.load %arg5[%c0_5, %c0_6] : memref<128x128xbf16, #tpu.memory_space<vmem>>, vector<128x128xbf16>
    %cst_7 = arith.constant dense<0.000000e+00> : vector<16x128xf32>
    %8 = tpu.matmul %6, %7, %cst_7 {dimension_numbers = #tpu.dot_dimension_numbers<[1], [0], [0], [1], [0, 0, 1, 1], [], []>} : vector<16x128xbf16>, vector<128x128xbf16>, vector<16x128xf32> -> vector<16x128xf32>
    %c0_8 = arith.constant 0 : index
    %c0_9 = arith.constant 0 : index
    %9 = vector.load %arg4[%c0_8, %c0_9] : memref<16x128xbf16, #tpu.memory_space<vmem>>, vector<16x128xbf16>
    %c0_10 = arith.constant 0 : index
    %c0_11 = arith.constant 0 : index
    %10 = vector.load %arg6[%c0_10, %c0_11] : memref<128x128xbf16, #tpu.memory_space<vmem>>, vector<128x128xbf16>
    %cst_12 = arith.constant dense<0.000000e+00> : vector<16x128xf32>
    %11 = tpu.matmul %9, %10, %cst_12 {dimension_numbers = #tpu.dot_dimension_numbers<[1], [0], [0], [1], [0, 0, 1, 1], [], []>} : vector<16x128xbf16>, vector<128x128xbf16>, vector<16x128xf32> -> vector<16x128xf32>
    %12 = arith.addf %8, %11 : vector<16x128xf32>
    %c0_13 = arith.constant 0 : index
    %c0_14 = arith.constant 0 : index
    %13 = vector.load %arg7[%c0_13, %c0_14] : memref<1x128xf32, #tpu.memory_space<vmem>>, vector<1x128xf32>
    %14 = vector.broadcast %13 : vector<1x128xf32> to vector<16x128xf32>
    %15 = arith.addf %12, %14 : vector<16x128xf32>
    %c0_15 = arith.constant 0 : index
    %c0_16 = arith.constant 0 : index
    %16 = vector.load %arg8[%c0_15, %c0_16] : memref<16x128xf32, #tpu.memory_space<vmem>>, vector<16x128xf32>
    tpu.vector_store %arg8[%c0_15, %c0_16], %15 {strides = array<i32>} : memref<16x128xf32, #tpu.memory_space<vmem>>, vector<16x128xf32>,
    return
  }
  func.func @transform_0(%arg0: i32) -> (i32, i32) {
    %c0_i32 = arith.constant 0 : i32
    %c0_i32_0 = arith.constant 0 : i32
    return %arg0, %c0_i32 : i32, i32
  }
  func.func @transform_1(%arg0: i32) -> (i32, i32) {
    %c0_i32 = arith.constant 0 : i32
    %c0_i32_0 = arith.constant 0 : i32
    return %arg0, %c0_i32 : i32, i32
  }
  func.func @transform_2(%arg0: i32) -> (i32, i32) {
    %c0_i32 = arith.constant 0 : i32
    %c0_i32_0 = arith.constant 0 : i32
    %c0_i32_1 = arith.constant 0 : i32
    return %c0_i32, %c0_i32_0 : i32, i32
  }
  func.func @transform_3(%arg0: i32) -> (i32, i32) {
    %c0_i32 = arith.constant 0 : i32
    %c0_i32_0 = arith.constant 0 : i32
    return %arg0, %c0_i32 : i32, i32
  }
  func.func @transform_4(%arg0: i32) -> (i32, i32) {
    %c0_i32 = arith.constant 0 : i32
    %c0_i32_0 = arith.constant 0 : i32
    %c0_i32_1 = arith.constant 0 : i32
    return %c0_i32, %c0_i32_0 : i32, i32
  }
  func.func @transform_5(%arg0: i32) -> (i32, i32) {
    %c0_i32 = arith.constant 0 : i32
    %c0_i32_0 = arith.constant 0 : i32
    %c0_i32_1 = arith.constant 0 : i32
    return %c0_i32, %c0_i32_0 : i32, i32
  }
  func.func @transform_6(%arg0: i32) -> (i32, i32) {
    %c0_i32 = arith.constant 0 : i32
    %c0_i32_0 = arith.constant 0 : i32
    %c0_i32_1 = arith.constant 0 : i32
    return %c0_i32, %c0_i32_0 : i32, i32
  }
  func.func @transform_7(%arg0: i32) -> (i32, i32) {
    %c0_i32 = arith.constant 0 : i32
    %c0_i32_0 = arith.constant 0 : i32
    return %arg0, %c0_i32 : i32, i32
  }
}

</mosaic_0001>

<llo_original>
// kernel: graphsage_forward.5
$region0: #{graphsage_forward.5}
  #allocation0 [shape = 'u32[]', space=smem, size = 0x4, offset = 0x4, fixed_abs, tag = 'smem constant byte address 0x4 - core index']
  #allocation1 [shape = 'u32[144,128]{1,0:T(1,128)}', space=vmem, size = 0x12000, scoped, tag = 'internal scratch']
  %s0 = inlined_call_operand.vmem [shape: bf16[16,16], index: 0, kind: input, shape index: {}]
  %s1 = inlined_call_operand.vmem [shape: f32[16,1], index: 1, kind: input, shape index: {}]
  %s2 = inlined_call_operand.vmem [shape: bf16[16,128], index: 2, kind: input, shape index: {}, may-alias: {2,3}]
  %s3 = inlined_call_operand.vmem [shape: bf16[16,128], index: 3, kind: input, shape index: {}, may-alias: {2,3}]
  %s4 = inlined_call_operand.vmem [shape: bf16[128,128], index: 4, kind: input, shape index: {}]
  %s5 = inlined_call_operand.vmem [shape: bf16[128,128], index: 5, kind: input, shape index: {}]
  %s6 = inlined_call_operand.vmem [shape: f32[1,128], index: 6, kind: input, shape index: {}]
  %s7 = inlined_call_operand.vmem [shape: f32[16,128], index: 7, kind: output, shape index: {}]
  %s8 = sld [smem:[#allocation0]]
  $region38: #{graphsage_forward.5} parent=0
    _
  %s10 = ssub.s32 1, %s8
  %s11 = scalar_select 0, %s10, %s8
  // Predicated region
  $region2: #{graphsage_forward.5} parent=0 // pred_check
    _
  $region3: #{graphsage_forward.5} parent=0 // pred_check_branch
    %13 = sbr.rel (0) target = $region5
  $region4: #{graphsage_forward.5} parent=0 // pred_region
    _
  $region5: #{graphsage_forward.5} parent=0 // pred_fallthru
    _
  // Predicated region
  $region6: #{graphsage_forward.5} parent=0 // pred_check
    _
  $region7: #{graphsage_forward.5} parent=0 // pred_check_branch
    %15 = sbr.rel (0) target = $region9
  $region8: #{graphsage_forward.5} parent=0 // pred_region
    _
  $region9: #{graphsage_forward.5} parent=0 // pred_fallthru
    _
  // Predicated region
  $region10: #{graphsage_forward.5} parent=0 // pred_check
    _
  $region11: #{graphsage_forward.5} parent=0 // pred_check_branch
    %17 = sbr.rel (0) target = $region13
  $region12: #{graphsage_forward.5} parent=0 // pred_region
    _
  $region13: #{graphsage_forward.5} parent=0 // pred_fallthru
    _
  // Predicated region
  $region14: #{graphsage_forward.5} parent=0 // pred_check
    _
  $region15: #{graphsage_forward.5} parent=0 // pred_check_branch
    %19 = sbr.rel (0) target = $region17
  $region16: #{graphsage_forward.5} parent=0 // pred_region
    _
  $region17: #{graphsage_forward.5} parent=0 // pred_fallthru
    _
  // Predicated region
  $region18: #{graphsage_forward.5} parent=0 // pred_check
    _
  $region19: #{graphsage_forward.5} parent=0 // pred_check_branch
    %21 = sbr.rel (0) target = $region21
  $region20: #{graphsage_forward.5} parent=0 // pred_region
    _
  $region21: #{graphsage_forward.5} parent=0 // pred_fallthru
    _
  // Predicated region
  $region22: #{graphsage_forward.5} parent=0 // pred_check
    _
  $region23: #{graphsage_forward.5} parent=0 // pred_check_branch
    %23 = sbr.rel (0) target = $region25
  $region24: #{graphsage_forward.5} parent=0 // pred_region
    _
  $region25: #{graphsage_forward.5} parent=0 // pred_fallthru
    _
  // Predicated region
  $region26: #{graphsage_forward.5} parent=0 // pred_check
    _
  $region27: #{graphsage_forward.5} parent=0 // pred_check_branch
    %25 = sbr.rel (0) target = $region29
  $region28: #{graphsage_forward.5} parent=0 // pred_region
    _
  $region29: #{graphsage_forward.5} parent=0 // pred_fallthru
    _
  %v27 = vld [vmem:[%s0] sm:$0xf]
  %v28 = vld [vmem:[%s0 + $0x4] sm:$0xf]
  %v29 = vld [vmem:[%s2] sm:$0xf]
  %v30 = vld [vmem:[%s2 + $0x4] sm:$0xf]
  %v33 = vunpack.c.l.b16 %v27
  %v34 = vunpack.c.l.b16 %v28
  %v35 = vpack.c.b16 %v34, %v33
  %v38 = vunpack.c.l.b16 %v29
  %v39 = vunpack.c.l.b16 %v30
  %v40 = vpack.c.b16 %v39, %v38
  %vm42 = vcmask 130048
  %v44 = vsel %vm42, %v35, 0
  %46 = vmatprep.subr.bf16.mxu0 0
  %47 = vmatpush1.bf16.msra.mxu0 0
  %48 = vmatprep.subr.bf16.mxu0 0
  %49 = vmatpush1.bf16.msra.mxu0 0
  %50 = vmatprep.subr.bf16.mxu0 0
  %51 = vmatpush1.bf16.msra.mxu0 0
  %52 = vmatprep.subr.bf16.mxu0 0
  %53 = vmatpush1.bf16.msra.mxu0 0
  %54 = vmatprep.subr.bf16.mxu0 0
  %55 = vmatpush1.bf16.msra.mxu0 0
  %56 = vmatprep.subr.bf16.mxu0 0
  %57 = vmatpush1.bf16.msra.mxu0 0
  %58 = vmatprep.subr.bf16.mxu0 0
  %59 = vmatpush1.bf16.msra.mxu0 0
  %60 = vmatprep.subr.bf16.mxu0 0
  %61 = vmatpush1.bf16.msra.mxu0 %v40
  %62 = vmatprep.subr.bf16.mxu0 0
  %63 = vmatpush2.bf16.msra.mxu0 0
  %64 = vmatprep.subr.bf16.mxu0 0
  %65 = vmatpush2.bf16.msra.mxu0 0
  %66 = vmatprep.subr.bf16.mxu0 0
  %67 = vmatpush2.bf16.msra.mxu0 0
  %68 = vmatprep.subr.bf16.mxu0 0
  %69 = vmatpush2.bf16.msra.mxu0 0
  %70 = vmatprep.subr.bf16.mxu0 0
  %71 = vmatpush2.bf16.msra.mxu0 0
  %72 = vmatprep.subr.bf16.mxu0 0
  %73 = vmatpush2.bf16.msra.mxu0 0
  %74 = vmatprep.subr.bf16.mxu0 0
  %75 = vmatpush2.bf16.msra.mxu0 0
  %76 = vmatprep.subr.bf16.mxu0 0
  %77 = vmatpush2.bf16.msra.mxu0 0
  %78 = vmatprep.mubr.bf16.mxu0 0
  %79 = vmatmul.mubr.bf16.gmra.mxu0 %v44
  %v80 = vpop.f32.mrf.mxu0
  %v81 = vadd.f32 0.0, %v80
  %v82 = vpop.f32.mrf.mxu0
  %v83 = vpop.f32.mrf.mxu0
  %v84 = vadd.f32 0.0, %v83
  %v85 = vpop.f32.mrf.mxu0
  %86 = vdwg.mxu0
  %v87 = vld [vmem:[%s1] sm:$0xff]
  %v88 = vld [vmem:[%s1 + $0x8] sm:$0xff]
  %90 = vset.pattern.permute.xlu0 0
  %91 = vperm.xlu0 %90, %v87
  %v92 = vpop.permute.xlu0 %91
  %95 = vset.pattern.permute.xlu0 0
  %96 = vperm.xlu0 %95, %v88
  %v97 = vpop.permute.xlu0 %96
  %v99 = vmul.f32 %v81, %v92
  %v100 = vmul.f32 %v84, %v97
  %v101 = vpack.c.bf16 %v100, %v99
  %v102 = vld [vmem:[%s4] sm:$0xf]
  %v103 = vld [vmem:[%s4 + $0x4] sm:$0xf]
  %v104 = vld [vmem:[%s4 + $0x8] sm:$0xf]
  %v105 = vld [vmem:[%s4 + $0xc] sm:$0xf]
  %v106 = vld [vmem:[%s4 + $0x10] sm:$0xf]
  %v107 = vld [vmem:[%s4 + $0x14] sm:$0xf]
  %v108 = vld [vmem:[%s4 + $0x18] sm:$0xf]
  %v109 = vld [vmem:[%s4 + $0x1c] sm:$0xf]
  %v110 = vld [vmem:[%s4 + $0x20] sm:$0xf]
  %v111 = vld [vmem:[%s4 + $0x24] sm:$0xf]
  %v112 = vld [vmem:[%s4 + $0x28] sm:$0xf]
  %v113 = vld [vmem:[%s4 + $0x2c] sm:$0xf]
  %v114 = vld [vmem:[%s4 + $0x30] sm:$0xf]
  %v115 = vld [vmem:[%s4 + $0x34] sm:$0xf]
  %v116 = vld [vmem:[%s4 + $0x38] sm:$0xf]
  %v117 = vld [vmem:[%s4 + $0x3c] sm:$0xf]
  %v118 = vld [vmem:[%s3] sm:$0xf]
  %v119 = vld [vmem:[%s3 + $0x4] sm:$0xf]
  %v120 = vld [vmem:[%s5] sm:$0xf]
  %v121 = vld [vmem:[%s5 + $0x4] sm:$0xf]
  %v122 = vld [vmem:[%s5 + $0x8] sm:$0xf]
  %v123 = vld [vmem:[%s5 + $0xc] sm:$0xf]
  %v124 = vld [vmem:[%s5 + $0x10] sm:$0xf]
  %v125 = vld [vmem:[%s5 + $0x14] sm:$0xf]
  %v126 = vld [vmem:[%s5 + $0x18] sm:$0xf]
  %v127 = vld [vmem:[%s5 + $0x1c] sm:$0xf]
  %v128 = vld [vmem:[%s5 + $0x20] sm:$0xf]
  %v129 = vld [vmem:[%s5 + $0x24] sm:$0xf]
  %v130 = vld [vmem:[%s5 + $0x28] sm:$0xf]
  %v131 = vld [vmem:[%s5 + $0x2c] sm:$0xf]
  %v132 = vld [vmem:[%s5 + $0x30] sm:$0xf]
  %v133 = vld [vmem:[%s5 + $0x34] sm:$0xf]
  %v134 = vld [vmem:[%s5 + $0x38] sm:$0xf]
  %v135 = vld [vmem:[%s5 + $0x3c] sm:$0xf]
  %v138 = vunpack.c.l.b16 %v118
  %v139 = vunpack.c.l.b16 %v119
  %v140 = vpack.c.b16 %v139, %v138
  %v158 = vunpack.c.l.b16 %v120
  %v159 = vunpack.c.l.b16 %v121
  %v160 = vunpack.c.l.b16 %v122
  %v161 = vunpack.c.l.b16 %v123
  %v162 = vunpack.c.l.b16 %v124
  %v163 = vunpack.c.l.b16 %v125
  %v164 = vunpack.c.l.b16 %v126
  %v165 = vunpack.c.l.b16 %v127
  %v166 = vunpack.c.l.b16 %v128
  %v167 = vunpack.c.l.b16 %v129
  %v168 = vunpack.c.l.b16 %v130
  %v169 = vunpack.c.l.b16 %v131
  %v170 = vunpack.c.l.b16 %v132
  %v171 = vunpack.c.l.b16 %v133
  %v172 = vunpack.c.l.b16 %v134
  %v173 = vunpack.c.l.b16 %v135
  %v174 = vpack.c.b16 %v159, %v158
  %v175 = vpack.c.b16 %v161, %v160
  %v176 = vpack.c.b16 %v163, %v162
  %v177 = vpack.c.b16 %v165, %v164
  %v178 = vpack.c.b16 %v167, %v166
  %v179 = vpack.c.b16 %v169, %v168
  %v180 = vpack.c.b16 %v171, %v170
  %v181 = vpack.c.b16 %v173, %v172
  %190 = vmatprep.subr.bf16.mxu0 0
  %191 = vmatpush1.bf16.msra.mxu0 %v181
  %192 = vmatprep.subr.bf16.mxu0 0
  %193 = vmatpush1.bf16.msra.mxu0 %v180
  %194 = vmatprep.subr.bf16.mxu0 0
  %195 = vmatpush1.bf16.msra.mxu0 %v179
  %196 = vmatprep.subr.bf16.mxu0 0
  %197 = vmatpush1.bf16.msra.mxu0 %v178
  %198 = vmatprep.subr.bf16.mxu0 0
  %199 = vmatpush1.bf16.msra.mxu0 %v177
  %200 = vmatprep.subr.bf16.mxu0 0
  %201 = vmatpush1.bf16.msra.mxu0 %v176
  %202 = vmatprep.subr.bf16.mxu0 0
  %203 = vmatpush1.bf16.msra.mxu0 %v175
  %204 = vmatprep.subr.bf16.mxu0 0
  %205 = vmatpush1.bf16.msra.mxu0 %v174
  %206 = vmatprep.subr.bf16.mxu0 0
  %207 = vmatpush2.bf16.msra.mxu0 0
  %208 = vmatprep.subr.bf16.mxu0 0
  %209 = vmatpush2.bf16.msra.mxu0 0
  %210 = vmatprep.subr.bf16.mxu0 0
  %211 = vmatpush2.bf16.msra.mxu0 0
  %212 = vmatprep.subr.bf16.mxu0 0
  %213 = vmatpush2.bf16.msra.mxu0 0
  %214 = vmatprep.subr.bf16.mxu0 0
  %215 = vmatpush2.bf16.msra.mxu0 0
  %216 = vmatprep.subr.bf16.mxu0 0
  %217 = vmatpush2.bf16.msra.mxu0 0
  %218 = vmatprep.subr.bf16.mxu0 0
  %219 = vmatpush2.bf16.msra.mxu0 0
  %220 = vmatprep.subr.bf16.mxu0 0
  %221 = vmatpush2.bf16.msra.mxu0 0
  %222 = vmatprep.mubr.bf16.mxu0 0
  %223 = vmatmul.mubr.bf16.gmra.mxu0 %v140
  %v224 = vpop.f32.mrf.mxu0
  %v225 = vadd.f32 0.0, %v224
  %v226 = vpop.f32.mrf.mxu0
  %v227 = vpop.f32.mrf.mxu0
  %v228 = vadd.f32 0.0, %v227
  %v229 = vpop.f32.mrf.mxu0
  %230 = vdwg.mxu0
  %v247 = vunpack.c.l.b16 %v102
  %v248 = vunpack.c.l.b16 %v103
  %v249 = vunpack.c.l.b16 %v104
  %v250 = vunpack.c.l.b16 %v105
  %v251 = vunpack.c.l.b16 %v106
  %v252 = vunpack.c.l.b16 %v107
  %v253 = vunpack.c.l.b16 %v108
  %v254 = vunpack.c.l.b16 %v109
  %v255 = vunpack.c.l.b16 %v110
  %v256 = vunpack.c.l.b16 %v111
  %v257 = vunpack.c.l.b16 %v112
  %v258 = vunpack.c.l.b16 %v113
  %v259 = vunpack.c.l.b16 %v114
  %v260 = vunpack.c.l.b16 %v115
  %v261 = vunpack.c.l.b16 %v116
  %v262 = vunpack.c.l.b16 %v117
  %v263 = vpack.c.b16 %v248, %v247
  %v264 = vpack.c.b16 %v250, %v249
  %v265 = vpack.c.b16 %v252, %v251
  %v266 = vpack.c.b16 %v254, %v253
  %v267 = vpack.c.b16 %v256, %v255
  %v268 = vpack.c.b16 %v258, %v257
  %v269 = vpack.c.b16 %v260, %v259
  %v270 = vpack.c.b16 %v262, %v261
  %279 = vmatprep.subr.bf16.mxu0 0
  %280 = vmatpush1.bf16.msra.mxu0 %v270
  %281 = vmatprep.subr.bf16.mxu0 0
  %282 = vmatpush1.bf16.msra.mxu0 %v269
  %283 = vmatprep.subr.bf16.mxu0 0
  %284 = vmatpush1.bf16.msra.mxu0 %v268
  %285 = vmatprep.subr.bf16.mxu0 0
  %286 = vmatpush1.bf16.msra.mxu0 %v267
  %287 = vmatprep.subr.bf16.mxu0 0
  %288 = vmatpush1.bf16.msra.mxu0 %v266
  %289 = vmatprep.subr.bf16.mxu0 0
  %290 = vmatpush1.bf16.msra.mxu0 %v265
  %291 = vmatprep.subr.bf16.mxu0 0
  %292 = vmatpush1.bf16.msra.mxu0 %v264
  %293 = vmatprep.subr.bf16.mxu0 0
  %294 = vmatpush1.bf16.msra.mxu0 %v263
  %295 = vmatprep.subr.bf16.mxu0 0
  %296 = vmatpush2.bf16.msra.mxu0 0
  %297 = vmatprep.subr.bf16.mxu0 0
  %298 = vmatpush2.bf16.msra.mxu0 0
  %299 = vmatprep.subr.bf16.mxu0 0
  %300 = vmatpush2.bf16.msra.mxu0 0
  %301 = vmatprep.subr.bf16.mxu0 0
  %302 = vmatpush2.bf16.msra.mxu0 0
  %303 = vmatprep.subr.bf16.mxu0 0
  %304 = vmatpush2.bf16.msra.mxu0 0
  %305 = vmatprep.subr.bf16.mxu0 0
  %306 = vmatpush2.bf16.msra.mxu0 0
  %307 = vmatprep.subr.bf16.mxu0 0
  %308 = vmatpush2.bf16.msra.mxu0 0
  %309 = vmatprep.subr.bf16.mxu0 0
  %310 = vmatpush2.bf16.msra.mxu0 0
  %311 = vmatprep.mubr.bf16.mxu0 0
  %312 = vmatmul.mubr.bf16.gmra.mxu0 %v101
  %v313 = vpop.f32.mrf.mxu0
  %v314 = vadd.f32 %v225, %v313
  %v315 = vpop.f32.mrf.mxu0
  %v316 = vpop.f32.mrf.mxu0
  %v317 = vadd.f32 %v228, %v316
  %v318 = vpop.f32.mrf.mxu0
  %319 = vdwg.mxu0
  %v320 = vld [vmem:[%s6] sm:$0x1]
  %v322 = vlaneseq
  %v323 = vshrl.u32 %v322, 7
  %v324 = vsub.s32 0, %v323
  %v325 = vrot.slane %v320, %v324
  %v327 = vadd.f32 %v314, %v325
  %v328 = vadd.f32 %v317, %v325
  %329 = vst [vmem:[%s7] sm:$0xff] %v327
  %330 = vst [vmem:[%s7 + $0x8] sm:$0xff] %v328
  // Predicated region
  $region30: #{graphsage_forward.5} parent=0 // pred_check
    _
  $region31: #{graphsage_forward.5} parent=0 // pred_check_branch
    %332 = sbr.rel (0) target = $region33
  $region32: #{graphsage_forward.5} parent=0 // pred_region
    _
  $region33: #{graphsage_forward.5} parent=0 // pred_fallthru
    _
  // Predicated region
  $region34: #{graphsage_forward.5} parent=0 // pred_check
    _
  $region35: #{graphsage_forward.5} parent=0 // pred_check_branch
    %334 = sbr.rel (0) target = $region37
  $region36: #{graphsage_forward.5} parent=0 // pred_region
    _
  $region37: #{graphsage_forward.5} parent=0 // pred_fallthru
    _

// kernel: graphsage_forward.3
$region0: #{graphsage_forward.3}
  #allocation0 [shape = 'u32[]', space=smem, size = 0x4, offset = 0x4, fixed_abs, tag = 'smem constant byte address 0x4 - core index']
  #allocation1 [shape = 'u32[144,128]{1,0:T(1,128)}', space=vmem, size = 0x12000, scoped, tag = 'internal scratch']
  %s0 = inlined_call_operand.vmem [shape: bf16[16,16], index: 0, kind: input, shape index: {}]
  %s1 = inlined_call_operand.vmem [shape: f32[16,1], index: 1, kind: input, shape index: {}]
  %s2 = inlined_call_operand.vmem [shape: bf16[16,128], index: 2, kind: input, shape index: {}, may-alias: {2,3}]
  %s3 = inlined_call_operand.vmem [shape: bf16[16,128], index: 3, kind: input, shape index: {}, may-alias: {2,3}]
  %s4 = inlined_call_operand.vmem [shape: bf16[128,128], index: 4, kind: input, shape index: {}]
  %s5 = inlined_call_operand.vmem [shape: bf16[128,128], index: 5, kind: input, shape index: {}]
  %s6 = inlined_call_operand.vmem [shape: f32[1,128], index: 6, kind: input, shape index: {}]
  %s7 = inlined_call_operand.vmem [shape: bf16[16,128], index: 7, kind: output, shape index: {}]
  %s8 = sld [smem:[#allocation0]]
  $region38: #{graphsage_forward.3} parent=0
    _
  %s10 = ssub.s32 1, %s8
  %s11 = scalar_select 0, %s10, %s8
  // Predicated region
  $region2: #{graphsage_forward.3} parent=0 // pred_check
    _
  $region3: #{graphsage_forward.3} parent=0 // pred_check_branch
    %13 = sbr.rel (0) target = $region5
  $region4: #{graphsage_forward.3} parent=0 // pred_region
    _
  $region5: #{graphsage_forward.3} parent=0 // pred_fallthru
    _
  // Predicated region
  $region6: #{graphsage_forward.3} parent=0 // pred_check
    _
  $region7: #{graphsage_forward.3} parent=0 // pred_check_branch
    %15 = sbr.rel (0) target = $region9
  $region8: #{graphsage_forward.3} parent=0 // pred_region
    _
  $region9: #{graphsage_forward.3} parent=0 // pred_fallthru
    _
  // Predicated region
  $region10: #{graphsage_forward.3} parent=0 // pred_check
    _
  $region11: #{graphsage_forward.3} parent=0 // pred_check_branch
    %17 = sbr.rel (0) target = $region13
  $region12: #{graphsage_forward.3} parent=0 // pred_region
    _
  $region13: #{graphsage_forward.3} parent=0 // pred_fallthru
    _
  // Predicated region
  $region14: #{graphsage_forward.3} parent=0 // pred_check
    _
  $region15: #{graphsage_forward.3} parent=0 // pred_check_branch
    %19 = sbr.rel (0) target = $region17
  $region16: #{graphsage_forward.3} parent=0 // pred_region
    _
  $region17: #{graphsage_forward.3} parent=0 // pred_fallthru
    _
  // Predicated region
  $region18: #{graphsage_forward.3} parent=0 // pred_check
    _
  $region19: #{graphsage_forward.3} parent=0 // pred_check_branch
    %21 = sbr.rel (0) target = $region21
  $region20: #{graphsage_forward.3} parent=0 // pred_region
    _
  $region21: #{graphsage_forward.3} parent=0 // pred_fallthru
    _
  // Predicated region
  $region22: #{graphsage_forward.3} parent=0 // pred_check
    _
  $region23: #{graphsage_forward.3} parent=0 // pred_check_branch
    %23 = sbr.rel (0) target = $region25
  $region24: #{graphsage_forward.3} parent=0 // pred_region
    _
  $region25: #{graphsage_forward.3} parent=0 // pred_fallthru
    _
  // Predicated region
  $region26: #{graphsage_forward.3} parent=0 // pred_check
    _
  $region27: #{graphsage_forward.3} parent=0 // pred_check_branch
    %25 = sbr.rel (0) target = $region29
  $region28: #{graphsage_forward.3} parent=0 // pred_region
    _
  $region29: #{graphsage_forward.3} parent=0 // pred_fallthru
    _
  %v27 = vld [vmem:[%s0] sm:$0xf]
  %v28 = vld [vmem:[%s0 + $0x4] sm:$0xf]
  %v29 = vld [vmem:[%s2] sm:$0xf]
  %v30 = vld [vmem:[%s2 + $0x4] sm:$0xf]
  %v33 = vunpack.c.l.b16 %v27
  %v34 = vunpack.c.l.b16 %v28
  %v35 = vpack.c.b16 %v34, %v33
  %v38 = vunpack.c.l.b16 %v29
  %v39 = vunpack.c.l.b16 %v30
  %v40 = vpack.c.b16 %v39, %v38
  %vm42 = vcmask 130048
  %v44 = vsel %vm42, %v35, 0
  %46 = vmatprep.subr.bf16.mxu0 0
  %47 = vmatpush1.bf16.msra.mxu0 0
  %48 = vmatprep.subr.bf16.mxu0 0
  %49 = vmatpush1.bf16.msra.mxu0 0
  %50 = vmatprep.subr.bf16.mxu0 0
  %51 = vmatpush1.bf16.msra.mxu0 0
  %52 = vmatprep.subr.bf16.mxu0 0
  %53 = vmatpush1.bf16.msra.mxu0 0
  %54 = vmatprep.subr.bf16.mxu0 0
  %55 = vmatpush1.bf16.msra.mxu0 0
  %56 = vmatprep.subr.bf16.mxu0 0
  %57 = vmatpush1.bf16.msra.mxu0 0
  %58 = vmatprep.subr.bf16.mxu0 0
  %59 = vmatpush1.bf16.msra.mxu0 0
  %60 = vmatprep.subr.bf16.mxu0 0
  %61 = vmatpush1.bf16.msra.mxu0 %v40
  %62 = vmatprep.subr.bf16.mxu0 0
  %63 = vmatpush2.bf16.msra.mxu0 0
  %64 = vmatprep.subr.bf16.mxu0 0
  %65 = vmatpush2.bf16.msra.mxu0 0
  %66 = vmatprep.subr.bf16.mxu0 0
  %67 = vmatpush2.bf16.msra.mxu0 0
  %68 = vmatprep.subr.bf16.mxu0 0
  %69 = vmatpush2.bf16.msra.mxu0 0
  %70 = vmatprep.subr.bf16.mxu0 0
  %71 = vmatpush2.bf16.msra.mxu0 0
  %72 = vmatprep.subr.bf16.mxu0 0
  %73 = vmatpush2.bf16.msra.mxu0 0
  %74 = vmatprep.subr.bf16.mxu0 0
  %75 = vmatpush2.bf16.msra.mxu0 0
  %76 = vmatprep.subr.bf16.mxu0 0
  %77 = vmatpush2.bf16.msra.mxu0 0
  %78 = vmatprep.mubr.bf16.mxu0 0
  %79 = vmatmul.mubr.bf16.gmra.mxu0 %v44
  %v80 = vpop.f32.mrf.mxu0
  %v81 = vadd.f32 0.0, %v80
  %v82 = vpop.f32.mrf.mxu0
  %v83 = vpop.f32.mrf.mxu0
  %v84 = vadd.f32 0.0, %v83
  %v85 = vpop.f32.mrf.mxu0
  %86 = vdwg.mxu0
  %v87 = vld [vmem:[%s1] sm:$0xff]
  %v88 = vld [vmem:[%s1 + $0x8] sm:$0xff]
  %90 = vset.pattern.permute.xlu0 0
  %91 = vperm.xlu0 %90, %v87
  %v92 = vpop.permute.xlu0 %91
  %95 = vset.pattern.permute.xlu0 0
  %96 = vperm.xlu0 %95, %v88
  %v97 = vpop.permute.xlu0 %96
  %v99 = vmul.f32 %v81, %v92
  %v100 = vmul.f32 %v84, %v97
  %v101 = vpack.c.bf16 %v100, %v99
  %v102 = vld [vmem:[%s4] sm:$0xf]
  %v103 = vld [vmem:[%s4 + $0x4] sm:$0xf]
  %v104 = vld [vmem:[%s4 + $0x8] sm:$0xf]
  %v105 = vld [vmem:[%s4 + $0xc] sm:$0xf]
  %v106 = vld [vmem:[%s4 + $0x10] sm:$0xf]
  %v107 = vld [vmem:[%s4 + $0x14] sm:$0xf]
  %v108 = vld [vmem:[%s4 + $0x18] sm:$0xf]
  %v109 = vld [vmem:[%s4 + $0x1c] sm:$0xf]
  %v110 = vld [vmem:[%s4 + $0x20] sm:$0xf]
  %v111 = vld [vmem:[%s4 + $0x24] sm:$0xf]
  %v112 = vld [vmem:[%s4 + $0x28] sm:$0xf]
  %v113 = vld [vmem:[%s4 + $0x2c] sm:$0xf]
  %v114 = vld [vmem:[%s4 + $0x30] sm:$0xf]
  %v115 = vld [vmem:[%s4 + $0x34] sm:$0xf]
  %v116 = vld [vmem:[%s4 + $0x38] sm:$0xf]
  %v117 = vld [vmem:[%s4 + $0x3c] sm:$0xf]
  %v118 = vld [vmem:[%s3] sm:$0xf]
  %v119 = vld [vmem:[%s3 + $0x4] sm:$0xf]
  %v120 = vld [vmem:[%s5] sm:$0xf]
  %v121 = vld [vmem:[%s5 + $0x4] sm:$0xf]
  %v122 = vld [vmem:[%s5 + $0x8] sm:$0xf]
  %v123 = vld [vmem:[%s5 + $0xc] sm:$0xf]
  %v124 = vld [vmem:[%s5 + $0x10] sm:$0xf]
  %v125 = vld [vmem:[%s5 + $0x14] sm:$0xf]
  %v126 = vld [vmem:[%s5 + $0x18] sm:$0xf]
  %v127 = vld [vmem:[%s5 + $0x1c] sm:$0xf]
  %v128 = vld [vmem:[%s5 + $0x20] sm:$0xf]
  %v129 = vld [vmem:[%s5 + $0x24] sm:$0xf]
  %v130 = vld [vmem:[%s5 + $0x28] sm:$0xf]
  %v131 = vld [vmem:[%s5 + $0x2c] sm:$0xf]
  %v132 = vld [vmem:[%s5 + $0x30] sm:$0xf]
  %v133 = vld [vmem:[%s5 + $0x34] sm:$0xf]
  %v134 = vld [vmem:[%s5 + $0x38] sm:$0xf]
  %v135 = vld [vmem:[%s5 + $0x3c] sm:$0xf]
  %v138 = vunpack.c.l.b16 %v118
  %v139 = vunpack.c.l.b16 %v119
  %v140 = vpack.c.b16 %v139, %v138
  %v158 = vunpack.c.l.b16 %v120
  %v159 = vunpack.c.l.b16 %v121
  %v160 = vunpack.c.l.b16 %v122
  %v161 = vunpack.c.l.b16 %v123
  %v162 = vunpack.c.l.b16 %v124
  %v163 = vunpack.c.l.b16 %v125
  %v164 = vunpack.c.l.b16 %v126
  %v165 = vunpack.c.l.b16 %v127
  %v166 = vunpack.c.l.b16 %v128
  %v167 = vunpack.c.l.b16 %v129
  %v168 = vunpack.c.l.b16 %v130
  %v169 = vunpack.c.l.b16 %v131
  %v170 = vunpack.c.l.b16 %v132
  %v171 = vunpack.c.l.b16 %v133
  %v172 = vunpack.c.l.b16 %v134
  %v173 = vunpack.c.l.b16 %v135
  %v174 = vpack.c.b16 %v159, %v158
  %v175 = vpack.c.b16 %v161, %v160
  %v176 = vpack.c.b16 %v163, %v162
  %v177 = vpack.c.b16 %v165, %v164
  %v178 = vpack.c.b16 %v167, %v166
  %v179 = vpack.c.b16 %v169, %v168
  %v180 = vpack.c.b16 %v171, %v170
  %v181 = vpack.c.b16 %v173, %v172
  %190 = vmatprep.subr.bf16.mxu0 0
  %191 = vmatpush1.bf16.msra.mxu0 %v181
  %192 = vmatprep.subr.bf16.mxu0 0
  %193 = vmatpush1.bf16.msra.mxu0 %v180
  %194 = vmatprep.subr.bf16.mxu0 0
  %195 = vmatpush1.bf16.msra.mxu0 %v179
  %196 = vmatprep.subr.bf16.mxu0 0
  %197 = vmatpush1.bf16.msra.mxu0 %v178
  %198 = vmatprep.subr.bf16.mxu0 0
  %199 = vmatpush1.bf16.msra.mxu0 %v177
  %200 = vmatprep.subr.bf16.mxu0 0
  %201 = vmatpush1.bf16.msra.mxu0 %v176
  %202 = vmatprep.subr.bf16.mxu0 0
  %203 = vmatpush1.bf16.msra.mxu0 %v175
  %204 = vmatprep.subr.bf16.mxu0 0
  %205 = vmatpush1.bf16.msra.mxu0 %v174
  %206 = vmatprep.subr.bf16.mxu0 0
  %207 = vmatpush2.bf16.msra.mxu0 0
  %208 = vmatprep.subr.bf16.mxu0 0
  %209 = vmatpush2.bf16.msra.mxu0 0
  %210 = vmatprep.subr.bf16.mxu0 0
  %211 = vmatpush2.bf16.msra.mxu0 0
  %212 = vmatprep.subr.bf16.mxu0 0
  %213 = vmatpush2.bf16.msra.mxu0 0
  %214 = vmatprep.subr.bf16.mxu0 0
  %215 = vmatpush2.bf16.msra.mxu0 0
  %216 = vmatprep.subr.bf16.mxu0 0
  %217 = vmatpush2.bf16.msra.mxu0 0
  %218 = vmatprep.subr.bf16.mxu0 0
  %219 = vmatpush2.bf16.msra.mxu0 0
  %220 = vmatprep.subr.bf16.mxu0 0
  %221 = vmatpush2.bf16.msra.mxu0 0
  %222 = vmatprep.mubr.bf16.mxu0 0
  %223 = vmatmul.mubr.bf16.gmra.mxu0 %v140
  %v224 = vpop.f32.mrf.mxu0
  %v225 = vadd.f32 0.0, %v224
  %v226 = vpop.f32.mrf.mxu0
  %v227 = vpop.f32.mrf.mxu0
  %v228 = vadd.f32 0.0, %v227
  %v229 = vpop.f32.mrf.mxu0
  %230 = vdwg.mxu0
  %v247 = vunpack.c.l.b16 %v102
  %v248 = vunpack.c.l.b16 %v103
  %v249 = vunpack.c.l.b16 %v104
  %v250 = vunpack.c.l.b16 %v105
  %v251 = vunpack.c.l.b16 %v106
  %v252 = vunpack.c.l.b16 %v107
  %v253 = vunpack.c.l.b16 %v108
  %v254 = vunpack.c.l.b16 %v109
  %v255 = vunpack.c.l.b16 %v110
  %v256 = vunpack.c.l.b16 %v111
  %v257 = vunpack.c.l.b16 %v112
  %v258 = vunpack.c.l.b16 %v113
  %v259 = vunpack.c.l.b16 %v114
  %v260 = vunpack.c.l.b16 %v115
  %v261 = vunpack.c.l.b16 %v116
  %v262 = vunpack.c.l.b16 %v117
  %v263 = vpack.c.b16 %v248, %v247
  %v264 = vpack.c.b16 %v250, %v249
  %v265 = vpack.c.b16 %v252, %v251
  %v266 = vpack.c.b16 %v254, %v253
  %v267 = vpack.c.b16 %v256, %v255
  %v268 = vpack.c.b16 %v258, %v257
  %v269 = vpack.c.b16 %v260, %v259
  %v270 = vpack.c.b16 %v262, %v261
  %279 = vmatprep.subr.bf16.mxu0 0
  %280 = vmatpush1.bf16.msra.mxu0 %v270
  %281 = vmatprep.subr.bf16.mxu0 0
  %282 = vmatpush1.bf16.msra.mxu0 %v269
  %283 = vmatprep.subr.bf16.mxu0 0
  %284 = vmatpush1.bf16.msra.mxu0 %v268
  %285 = vmatprep.subr.bf16.mxu0 0
  %286 = vmatpush1.bf16.msra.mxu0 %v267
  %287 = vmatprep.subr.bf16.mxu0 0
  %288 = vmatpush1.bf16.msra.mxu0 %v266
  %289 = vmatprep.subr.bf16.mxu0 0
  %290 = vmatpush1.bf16.msra.mxu0 %v265
  %291 = vmatprep.subr.bf16.mxu0 0
  %292 = vmatpush1.bf16.msra.mxu0 %v264
  %293 = vmatprep.subr.bf16.mxu0 0
  %294 = vmatpush1.bf16.msra.mxu0 %v263
  %295 = vmatprep.subr.bf16.mxu0 0
  %296 = vmatpush2.bf16.msra.mxu0 0
  %297 = vmatprep.subr.bf16.mxu0 0
  %298 = vmatpush2.bf16.msra.mxu0 0
  %299 = vmatprep.subr.bf16.mxu0 0
  %300 = vmatpush2.bf16.msra.mxu0 0
  %301 = vmatprep.subr.bf16.mxu0 0
  %302 = vmatpush2.bf16.msra.mxu0 0
  %303 = vmatprep.subr.bf16.mxu0 0
  %304 = vmatpush2.bf16.msra.mxu0 0
  %305 = vmatprep.subr.bf16.mxu0 0
  %306 = vmatpush2.bf16.msra.mxu0 0
  %307 = vmatprep.subr.bf16.mxu0 0
  %308 = vmatpush2.bf16.msra.mxu0 0
  %309 = vmatprep.subr.bf16.mxu0 0
  %310 = vmatpush2.bf16.msra.mxu0 0
  %311 = vmatprep.mubr.bf16.mxu0 0
  %312 = vmatmul.mubr.bf16.gmra.mxu0 %v101
  %v313 = vpop.f32.mrf.mxu0
  %v314 = vadd.f32 %v225, %v313
  %v315 = vpop.f32.mrf.mxu0
  %v316 = vpop.f32.mrf.mxu0
  %v317 = vadd.f32 %v228, %v316
  %v318 = vpop.f32.mrf.mxu0
  %319 = vdwg.mxu0
  %v320 = vld [vmem:[%s6] sm:$0x1]
  %v322 = vlaneseq
  %v323 = vshrl.u32 %v322, 7
  %v324 = vsub.s32 0, %v323
  %v325 = vrot.slane %v320, %v324
  %v327 = vadd.f32 %v314, %v325
  %v328 = vadd.f32 %v317, %v325
  %v329 = vmax.f32 %v327, 0.0
  %v330 = vmax.f32 %v328, 0.0
  %v331 = vpack.c.bf16 %v330, %v329
  %v333 = vunpack.c.l.b16 %v331
  %v334 = vunpack.c.h.b16 %v331
  %v335 = vpack.c.b16 %v333, %v333
  %v336 = vpack.c.b16 %v334, %v334
  %339 = vst [vmem:[%s7] sm:$0xf] %v335
  %340 = vst [vmem:[%s7 + $0x4] sm:$0xf] %v336
  // Predicated region
  $region30: #{graphsage_forward.3} parent=0 // pred_check
    _
  $region31: #{graphsage_forward.3} parent=0 // pred_check_branch
    %342 = sbr.rel (0) target = $region33
  $region32: #{graphsage_forward.3} parent=0 // pred_region
    _
  $region33: #{graphsage_forward.3} parent=0 // pred_fallthru
    _
  // Predicated region
  $region34: #{graphsage_forward.3} parent=0 // pred_check
    _
  $region35: #{graphsage_forward.3} parent=0 // pred_check_branch
    %344 = sbr.rel (0) target = $region37
  $region36: #{graphsage_forward.3} parent=0 // pred_region
    _
  $region37: #{graphsage_forward.3} parent=0 // pred_fallthru
    _

</llo_original>
